<compile_context>
chip_gen: v6e
topology: v6e:2x2x1
jax: 0.10.0
libtpu: 0.0.40
codegen_flags: <defaults>
</compile_context>

<pallas_src>
import functools

import jax
import jax.numpy as jnp
from jax import lax
from jax.experimental import pallas as pl
from jax.experimental.pallas import tpu as pltpu


def _loss_kernel(x_rows_ref, x_cols_ref, mask_ref, partial_ref,
                 m_sc, l_sc, cnt_sc, md_sc,
                 *, temperature, tm, tn, use_bf16_exp):
    i = pl.program_id(0)
    j = pl.program_id(1)
    nj = pl.num_programs(1)

    inv_t = jnp.float32(1.0 / temperature)

    @pl.when(j == 0)
    def _():
        m_sc[...] = jnp.full_like(m_sc, -jnp.inf)
        l_sc[...] = jnp.zeros_like(l_sc)
        cnt_sc[...] = jnp.zeros_like(cnt_sc)
        md_sc[...] = jnp.zeros_like(md_sc)

    # Row tile with 1/T folded into the bf16 MXU operand; column tile as-is.
    xr = x_rows_ref[...]                                           # [TM, Dp] bf16
    xs = (xr.astype(jnp.float32) * inv_t).astype(jnp.bfloat16)     # [TM, Dp] bf16
    xc = x_cols_ref[...]                                           # [TN, Dp] bf16

    # Logits tile; transpose folded into the contraction (shared D axis).
    dot = lax.dot_general(
        xs, xc,
        dimension_numbers=(((1,), (1,)), ((), ())),
        preferred_element_type=jnp.float32)                        # [TM, TN] f32

    # Exact in-matrix diagonal exclusion for the softmax denominator.
    row_idx = i * tm + lax.broadcasted_iota(jnp.int32, (tm, tn), 0)
    col_idx = j * tn + lax.broadcasted_iota(jnp.int32, (tm, tn), 1)
    dot_nd = jnp.where(row_idx == col_idx, jnp.float32(-1e30), dot)

    # Online-softmax accumulation of the diag-excluded denominator, stabilized
    # by the diag-inclusive running row max (matches the reference stabilizer).
    tile_max = jnp.max(dot, axis=1, keepdims=True)                 # [TM, 1]
    m_prev = m_sc[...]
    m_new = jnp.maximum(m_prev, tile_max)
    corr = jnp.exp(m_prev - m_new)

    shifted = dot_nd - m_new                                       # [TM, TN]
    if use_bf16_exp:
        # v6e/v7x: EUP supports bf16 (~2x exp throughput); accumulate in f32.
        exp_tile = jnp.exp(shifted.astype(jnp.bfloat16)).astype(jnp.float32)
    else:
        exp_tile = jnp.exp(shifted)

    l_sc[...] = corr * l_sc[...] + jnp.sum(exp_tile, axis=1, keepdims=True)
    m_sc[...] = m_new

    # Mask stays int8/bool: no f32 mask materialization, no m*shifted product.
    msk = mask_ref[...] != 0                                       # [TM, TN] bool
    cnt_sc[...] += jnp.sum(msk.astype(jnp.float32), axis=1, keepdims=True)
    md_sc[...] += jnp.sum(jnp.where(msk, dot, 0.0), axis=1, keepdims=True)

    @pl.when(j == nj - 1)
    def _():
        cnt = cnt_sc[...]                                          # [TM, 1]
        log_denom = m_sc[...] + jnp.log(l_sc[...])                 # [TM, 1]
        # sum_j mask*log_probs = sum_j mask*dot - count * log(denominator)
        row_sum = md_sc[...] - cnt * log_denom
        has_row = cnt > 0.0
        per_row = jnp.where(has_row, -row_sum / jnp.where(has_row, cnt, 1.0), 0.0)
        loss_sum = jnp.sum(per_row)
        num_rows = jnp.sum(has_row.astype(jnp.float32))

        # Lane-dense (8,128) output block; partial sums live at [0,0] / [0,1].
        rr = lax.broadcasted_iota(jnp.int32, (8, 128), 0)
        cc = lax.broadcasted_iota(jnp.int32, (8, 128), 1)
        partial_ref[...] = jnp.where(
            (rr == 0) & (cc == 0), loss_sum,
            jnp.where((rr == 0) & (cc == 1), num_rows, jnp.float32(0.0)))


def _device_defaults():
    """Generation-aware knobs (TM cap, VMEM limit, bf16-exp availability)."""
    kind = jax.devices()[0].device_kind.lower()
    is_v7 = ("v7" in kind) or ("7x" in kind)
    use_bf16_exp = ("v6" in kind) or is_v7          # EUP bf16 only on v6e/v7x
    vmem_limit = (52 if is_v7 else 96) * 1024 * 1024
    max_tm = 128 if is_v7 else 256
    return use_bf16_exp, vmem_limit, max_tm


def _pick_tile(n, candidates, cap=None, min_blocks=1):
    for t in candidates:
        if cap is not None and t > cap:
            continue
        if n % t == 0 and n // t >= min_blocks:
            return t
    return n  # fallback: full extent (single block along this axis)


def magi_loss(out, mask, *, temperature=0.07, scale_by_temperature=True):
    """out: [N, D] float, mask: [N, N] dense 0/1 (any float/int). Scalar loss."""
    n, d = out.shape
    use_bf16_exp, vmem_limit, max_tm = _device_defaults()

    tm = _pick_tile(n, (256, 128, 64, 32), cap=max_tm, min_blocks=2)
    tn = _pick_tile(n, (512, 256, 128), cap=None, min_blocks=1)
    num_i = n // tm
    num_j = n // tn

    # Lane-dense D: zero-pad feature dim to a multiple of 128 (zeros contribute
    # nothing to the dot products).
    dp = ((d + 127) // 128) * 128
    out_bf16 = out.astype(jnp.bfloat16)
    if dp != d:
        out_bf16 = jnp.pad(out_bf16, ((0, 0), (0, dp - d)))

    mask_i8 = (mask != 0).astype(jnp.int8)    # 0/1 mask shipped as int8

    kernel = functools.partial(
        _loss_kernel, temperature=float(temperature),
        tm=tm, tn=tn, use_bf16_exp=use_bf16_exp)

    partials = pl.pallas_call(
        kernel,
        out_shape=jax.ShapeDtypeStruct((num_i * 8, 128), jnp.float32),
        grid_spec=pltpu.PrefetchScalarGridSpec(
            num_scalar_prefetch=0,
            grid=(num_i, num_j),
            in_specs=[
                pl.BlockSpec((tm, dp), lambda i, j: (i, 0)),   # row tile of out
                pl.BlockSpec((tn, dp), lambda i, j: (j, 0)),   # column tile of out
                pl.BlockSpec((tm, tn), lambda i, j: (i, j)),   # mask tile (int8)
            ],
            out_specs=pl.BlockSpec((8, 128), lambda i, j: (i, 0)),
            scratch_shapes=[pltpu.VMEM((tm, 1), jnp.float32)] * 4,  # m, l, cnt, md
        ),
        compiler_params=pltpu.CompilerParams(
            dimension_semantics=("parallel", "arbitrary"),
            vmem_limit_bytes=vmem_limit,
        ),
    )(out_bf16, out_bf16, mask_i8)

    # Tiny final reduction / divide on scalars in plain JAX.
    loss_sum = jnp.sum(partials[:, 0])
    num_rows = jnp.sum(partials[:, 1])   # NaN if mask is all-zero, same as reference
    loss = loss_sum / num_rows
    if scale_by_temperature:
        loss = loss * temperature
    return loss


def magi_loss_ref(out, mask, *, temperature=0.07, scale_by_temperature=True):
    """Pure-JAX f32 reference mirroring the PyTorch forward (dense mask form)."""
    out = out.astype(jnp.float32)
    mask = (mask != 0).astype(jnp.float32)
    n = out.shape[0]
    dot = (out @ out.T) / temperature
    dot = dot - jnp.max(dot, axis=1, keepdims=True)
    logits_mask = 1.0 - jnp.eye(n, dtype=jnp.float32)
    exp_logits = jnp.exp(dot) * logits_mask
    log_probs = dot - jnp.log(jnp.sum(exp_logits, axis=1, keepdims=True))
    count = jnp.sum(mask, axis=1)
    row_sum = jnp.sum(mask * log_probs, axis=1)
    has_row = count > 0
    per_row = jnp.where(has_row, -row_sum / jnp.where(has_row, count, 1.0), 0.0)
    loss = jnp.sum(per_row) / jnp.sum(has_row.astype(jnp.float32))
    if scale_by_temperature:
        loss = loss * temperature
    return loss


if __name__ == "__main__":
    key = jax.random.PRNGKey(0)
    k_out, k_mask = jax.random.split(key)

    N, D = 128, 32  # batch of node embeddings
    out = jax.random.normal(k_out, (N, D), dtype=jnp.float32)
    # L2-normalize rows (typical for this contrastive loss; keeps logits tame).
    out = out / jnp.linalg.norm(out, axis=1, keepdims=True)

    # Synthetic sparse positive-pair mask as a dense 0/1 matrix.
    # Every row includes the diagonal (so the row set is {0..N-1}, matching the
    # implicit assumption in the PyTorch scatter_add_ path), plus ~5% random
    # extra positives, symmetrized.
    rand = jax.random.uniform(k_mask, (N, N))
    extra = (rand < 0.05).astype(jnp.float32)
    extra = jnp.maximum(extra, extra.T)
    mask = jnp.clip(extra + jnp.eye(N, dtype=jnp.float32), 0.0, 1.0)

    loss = magi_loss(out, mask, temperature=0.07, scale_by_temperature=True)
    loss = jax.block_until_ready(loss)

    ref = magi_loss_ref(out, mask, temperature=0.07, scale_by_temperature=True)
    assert jnp.isfinite(loss), "loss is not finite"
    # MXU operands are bf16 (f32 accumulate), exp may run in bf16 on v6e/v7x:
    # expected deviation from the pure f32 reference is well under 1%.
    assert jnp.allclose(loss, ref, rtol=2e-2, atol=1e-3), (loss, ref)

    print("KERNEL_OK")
</pallas_src>

<mosaic_0001>
module attributes {stable_mosaic.version = 11 : i64} {
  func.func @_loss_kernel(%arg0: i32, %arg1: i32, %arg2: memref<64x128xbf16, #tpu.memory_space<vmem>>, %arg3: memref<128x128xbf16, #tpu.memory_space<vmem>>, %arg4: memref<64x128xi8, #tpu.memory_space<vmem>>, %arg5: memref<8x128xf32, #tpu.memory_space<vmem>>, %arg6: memref<64x1xf32, #tpu.memory_space<vmem>>, %arg7: memref<64x1xf32, #tpu.memory_space<vmem>>, %arg8: memref<64x1xf32, #tpu.memory_space<vmem>>, %arg9: memref<64x1xf32, #tpu.memory_space<vmem>>) attributes {dimension_semantics = [#tpu.dimension_semantics<parallel>, #tpu.dimension_semantics<arbitrary>], iteration_bounds = array<i64: 2, 1>, scalar_prefetch = 0 : i64, scratch_operands = 4 : i64, tpu.core_type = #tpu.core_type<tc>, window_params = [{transform_indices = @transform_0, window_bounds = array<i64: 64, 128>}, {transform_indices = @transform_1, window_bounds = array<i64: 128, 128>}, {transform_indices = @transform_2, window_bounds = array<i64: 64, 128>}, {transform_indices = @transform_3, window_bounds = array<i64: 8, 128>}]} {
    %c0_i32 = arith.constant 0 : i32
    %0 = arith.cmpi eq, %arg1, %c0_i32 : i32
    %1 = arith.extui %0 : i1 to i32
    %c0_i32_0 = arith.constant 0 : i32
    %2 = arith.cmpi ne, %1, %c0_i32_0 : i32
    scf.if %2 {
      %cst_31 = arith.constant 0xFF800000 : f32
      %57 = vector.broadcast %cst_31 : f32 to vector<64x1xf32>
      %c0_32 = arith.constant 0 : index
      %c0_33 = arith.constant 0 : index
      %58 = vector.load %arg6[%c0_32, %c0_33] : memref<64x1xf32, #tpu.memory_space<vmem>>, vector<64x1xf32>
      tpu.vector_store %arg6[%c0_32, %c0_33], %57 {strides = array<i32>} : memref<64x1xf32, #tpu.memory_space<vmem>>, vector<64x1xf32>,
      %cst_34 = arith.constant 0.000000e+00 : f32
      %59 = vector.broadcast %cst_34 : f32 to vector<64x1xf32>
      %c0_35 = arith.constant 0 : index
      %c0_36 = arith.constant 0 : index
      %60 = vector.load %arg7[%c0_35, %c0_36] : memref<64x1xf32, #tpu.memory_space<vmem>>, vector<64x1xf32>
      tpu.vector_store %arg7[%c0_35, %c0_36], %59 {strides = array<i32>} : memref<64x1xf32, #tpu.memory_space<vmem>>, vector<64x1xf32>,
      %cst_37 = arith.constant 0.000000e+00 : f32
      %61 = vector.broadcast %cst_37 : f32 to vector<64x1xf32>
      %c0_38 = arith.constant 0 : index
      %c0_39 = arith.constant 0 : index
      %62 = vector.load %arg8[%c0_38, %c0_39] : memref<64x1xf32, #tpu.memory_space<vmem>>, vector<64x1xf32>
      tpu.vector_store %arg8[%c0_38, %c0_39], %61 {strides = array<i32>} : memref<64x1xf32, #tpu.memory_space<vmem>>, vector<64x1xf32>,
      %cst_40 = arith.constant 0.000000e+00 : f32
      %63 = vector.broadcast %cst_40 : f32 to vector<64x1xf32>
      %c0_41 = arith.constant 0 : index
      %c0_42 = arith.constant 0 : index
      %64 = vector.load %arg9[%c0_41, %c0_42] : memref<64x1xf32, #tpu.memory_space<vmem>>, vector<64x1xf32>
      tpu.vector_store %arg9[%c0_41, %c0_42], %63 {strides = array<i32>} : memref<64x1xf32, #tpu.memory_space<vmem>>, vector<64x1xf32>,
    } else {
    }
    %c0 = arith.constant 0 : index
    %c0_1 = arith.constant 0 : index
    %3 = vector.load %arg2[%c0, %c0_1] : memref<64x128xbf16, #tpu.memory_space<vmem>>, vector<64x128xbf16>
    %4 = arith.extf %3 : vector<64x128xbf16> to vector<64x128xf32>
    %cst = arith.constant 14.2857141 : f32
    %5 = vector.broadcast %cst : f32 to vector<64x128xf32>
    %6 = arith.mulf %4, %5 : vector<64x128xf32>
    %7 = arith.truncf %6 : vector<64x128xf32> to vector<64x128xbf16>
    %c0_2 = arith.constant 0 : index
    %c0_3 = arith.constant 0 : index
    %8 = vector.load %arg3[%c0_2, %c0_3] : memref<128x128xbf16, #tpu.memory_space<vmem>>, vector<128x128xbf16>
    %cst_4 = arith.constant dense<0.000000e+00> : vector<64x128xf32>
    %9 = tpu.matmul %7, %8, %cst_4 {dimension_numbers = #tpu.dot_dimension_numbers<[1], [1], [0], [0], [0, 0, 1, 0], [], []>} : vector<64x128xbf16>, vector<128x128xbf16>, vector<64x128xf32> -> vector<64x128xf32>
    %c64_i32 = arith.constant 64 : i32
    %10 = arith.muli %arg0, %c64_i32 : i32
    %11 = tpu.iota {dimensions = array<i32: 0>} : vector<64x128xi32>
    %12 = vector.broadcast %10 : i32 to vector<64x128xi32>
    %13 = arith.addi %12, %11 : vector<64x128xi32>
    %c128_i32 = arith.constant 128 : i32
    %14 = arith.muli %arg1, %c128_i32 : i32
    %15 = tpu.iota {dimensions = array<i32: 1>} : vector<64x128xi32>
    %16 = vector.broadcast %14 : i32 to vector<64x128xi32>
    %17 = arith.addi %16, %15 : vector<64x128xi32>
    %18 = arith.cmpi eq, %13, %17 : vector<64x128xi32>
    %cst_5 = arith.constant -1.000000e+30 : f32
    %19 = vector.broadcast %cst_5 : f32 to vector<64x128xf32>
    %20 = arith.select %18, %19, %9 : vector<64x128xi1>, vector<64x128xf32>
    %cst_6 = arith.constant dense<0xFF800000> : vector<64xf32>
    %21 = vector.multi_reduction <maximumf>, %9, %cst_6 [1] : vector<64x128xf32> to vector<64xf32>
    %22 = vector.shape_cast %21 : vector<64xf32> to vector<64x1xf32>
    %c0_7 = arith.constant 0 : index
    %c0_8 = arith.constant 0 : index
    %23 = vector.load %arg6[%c0_7, %c0_8] : memref<64x1xf32, #tpu.memory_space<vmem>>, vector<64x1xf32>
    %24 = arith.maximumf %23, %22 : vector<64x1xf32>
    %25 = arith.subf %23, %24 : vector<64x1xf32>
    %26 = math.exp %25 : vector<64x1xf32>
    %27 = vector.broadcast %24 : vector<64x1xf32> to vector<64x128xf32>
    %28 = arith.subf %20, %27 : vector<64x128xf32>
    %29 = math.exp %28 : vector<64x128xf32>
    %c0_9 = arith.constant 0 : index
    %c0_10 = arith.constant 0 : index
    %30 = vector.load %arg7[%c0_9, %c0_10] : memref<64x1xf32, #tpu.memory_space<vmem>>, vector<64x1xf32>
    %31 = arith.mulf %26, %30 : vector<64x1xf32>
    %cst_11 = arith.constant dense<0.000000e+00> : vector<64xf32>
    %32 = vector.multi_reduction <add>, %29, %cst_11 [1] : vector<64x128xf32> to vector<64xf32>
    %33 = vector.shape_cast %32 : vector<64xf32> to vector<64x1xf32>
    %34 = arith.addf %31, %33 : vector<64x1xf32>
    %c0_12 = arith.constant 0 : index
    %c0_13 = arith.constant 0 : index
    %35 = vector.load %arg7[%c0_12, %c0_13] : memref<64x1xf32, #tpu.memory_space<vmem>>, vector<64x1xf32>
    tpu.vector_store %arg7[%c0_12, %c0_13], %34 {strides = array<i32>} : memref<64x1xf32, #tpu.memory_space<vmem>>, vector<64x1xf32>,
    %c0_14 = arith.constant 0 : index
    %c0_15 = arith.constant 0 : index
    %36 = vector.load %arg6[%c0_14, %c0_15] : memref<64x1xf32, #tpu.memory_space<vmem>>, vector<64x1xf32>
    tpu.vector_store %arg6[%c0_14, %c0_15], %24 {strides = array<i32>} : memref<64x1xf32, #tpu.memory_space<vmem>>, vector<64x1xf32>,
    %c0_16 = arith.constant 0 : index
    %c0_17 = arith.constant 0 : index
    %37 = vector.load %arg4[%c0_16, %c0_17] : memref<64x128xi8, #tpu.memory_space<vmem>>, vector<64x128xi8>
    %c0_i8 = arith.constant 0 : i8
    %38 = vector.broadcast %c0_i8 : i8 to vector<64x128xi8>
    %39 = arith.cmpi ne, %37, %38 : vector<64x128xi8>
    %c0_18 = arith.constant 0 : index
    %c0_19 = arith.constant 0 : index
    %40 = vector.load %arg8[%c0_18, %c0_19] : memref<64x1xf32, #tpu.memory_space<vmem>>, vector<64x1xf32>
    %41 = arith.extui %39 : vector<64x128xi1> to vector<64x128xi32>
    %42 = arith.sitofp %41 : vector<64x128xi32> to vector<64x128xf32>
    %cst_20 = arith.constant dense<0.000000e+00> : vector<64xf32>
    %43 = vector.multi_reduction <add>, %42, %cst_20 [1] : vector<64x128xf32> to vector<64xf32>
    %44 = vector.shape_cast %43 : vector<64xf32> to vector<64x1xf32>
    %45 = arith.addf %40, %44 : vector<64x1xf32>
    %c0_21 = arith.constant 0 : index
    %c0_22 = arith.constant 0 : index
    %46 = vector.load %arg8[%c0_21, %c0_22] : memref<64x1xf32, #tpu.memory_space<vmem>>, vector<64x1xf32>
    tpu.vector_store %arg8[%c0_21, %c0_22], %45 {strides = array<i32>} : memref<64x1xf32, #tpu.memory_space<vmem>>, vector<64x1xf32>,
    %c0_23 = arith.constant 0 : index
    %c0_24 = arith.constant 0 : index
    %47 = vector.load %arg9[%c0_23, %c0_24] : memref<64x1xf32, #tpu.memory_space<vmem>>, vector<64x1xf32>
    %cst_25 = arith.constant 0.000000e+00 : f32
    %48 = vector.broadcast %cst_25 : f32 to vector<64x128xf32>
    %49 = arith.select %39, %9, %48 : vector<64x128xi1>, vector<64x128xf32>
    %cst_26 = arith.constant dense<0.000000e+00> : vector<64xf32>
    %50 = vector.multi_reduction <add>, %49, %cst_26 [1] : vector<64x128xf32> to vector<64xf32>
    %51 = vector.shape_cast %50 : vector<64xf32> to vector<64x1xf32>
    %52 = arith.addf %47, %51 : vector<64x1xf32>
    %c0_27 = arith.constant 0 : index
    %c0_28 = arith.constant 0 : index
    %53 = vector.load %arg9[%c0_27, %c0_28] : memref<64x1xf32, #tpu.memory_space<vmem>>, vector<64x1xf32>
    tpu.vector_store %arg9[%c0_27, %c0_28], %52 {strides = array<i32>} : memref<64x1xf32, #tpu.memory_space<vmem>>, vector<64x1xf32>,
    %c0_i32_29 = arith.constant 0 : i32
    %54 = arith.cmpi eq, %arg1, %c0_i32_29 : i32
    %55 = arith.extui %54 : i1 to i32
    %c0_i32_30 = arith.constant 0 : i32
    %56 = arith.cmpi ne, %55, %c0_i32_30 : i32
    scf.if %56 {
      %c0_31 = arith.constant 0 : index
      %c0_32 = arith.constant 0 : index
      %57 = vector.load %arg8[%c0_31, %c0_32] : memref<64x1xf32, #tpu.memory_space<vmem>>, vector<64x1xf32>
      %c0_33 = arith.constant 0 : index
      %c0_34 = arith.constant 0 : index
      %58 = vector.load %arg6[%c0_33, %c0_34] : memref<64x1xf32, #tpu.memory_space<vmem>>, vector<64x1xf32>
      %c0_35 = arith.constant 0 : index
      %c0_36 = arith.constant 0 : index
      %59 = vector.load %arg7[%c0_35, %c0_36] : memref<64x1xf32, #tpu.memory_space<vmem>>, vector<64x1xf32>
      %60 = math.log %59 : vector<64x1xf32>
      %61 = arith.addf %58, %60 : vector<64x1xf32>
      %c0_37 = arith.constant 0 : index
      %c0_38 = arith.constant 0 : index
      %62 = vector.load %arg9[%c0_37, %c0_38] : memref<64x1xf32, #tpu.memory_space<vmem>>, vector<64x1xf32>
      %63 = arith.mulf %57, %61 : vector<64x1xf32>
      %64 = arith.subf %62, %63 : vector<64x1xf32>
      %cst_39 = arith.constant 0.000000e+00 : f32
      %65 = vector.broadcast %cst_39 : f32 to vector<64x1xf32>
      %66 = arith.cmpf ogt, %57, %65 : vector<64x1xf32>
      %cst_40 = arith.constant 0.000000e+00 : f32
      %67 = vector.broadcast %cst_40 : f32 to vector<64x1xf32>
      %68 = arith.subf %67, %64 : vector<64x1xf32>
      %cst_41 = arith.constant 1.000000e+00 : f32
      %69 = vector.broadcast %cst_41 : f32 to vector<64x1xf32>
      %70 = arith.select %66, %57, %69 : vector<64x1xi1>, vector<64x1xf32>
      %71 = arith.divf %68, %70 : vector<64x1xf32>
      %cst_42 = arith.constant 0.000000e+00 : f32
      %72 = vector.broadcast %cst_42 : f32 to vector<64x1xf32>
      %73 = arith.select %66, %71, %72 : vector<64x1xi1>, vector<64x1xf32>
      %74 = vector.shape_cast %73 : vector<64x1xf32> to vector<1x64x1xf32>
      %cst_43 = arith.constant dense<0.000000e+00> : vector<1xf32>
      %75 = vector.multi_reduction <add>, %74, %cst_43 [1, 2] : vector<1x64x1xf32> to vector<1xf32>
      %76 = vector.shape_cast %75 : vector<1xf32> to vector<1x1x1xf32>
      %77 = vector.extract %76[0, 0, 0] : f32 from vector<1x1x1xf32>
      %78 = arith.extui %66 : vector<64x1xi1> to vector<64x1xi32>
      %79 = arith.sitofp %78 : vector<64x1xi32> to vector<64x1xf32>
      %80 = vector.shape_cast %79 : vector<64x1xf32> to vector<1x64x1xf32>
      %cst_44 = arith.constant dense<0.000000e+00> : vector<1xf32>
      %81 = vector.multi_reduction <add>, %80, %cst_44 [1, 2] : vector<1x64x1xf32> to vector<1xf32>
      %82 = vector.shape_cast %81 : vector<1xf32> to vector<1x1x1xf32>
      %83 = vector.extract %82[0, 0, 0] : f32 from vector<1x1x1xf32>
      %84 = tpu.iota {dimensions = array<i32: 0>} : vector<8x128xi32>
      %85 = tpu.iota {dimensions = array<i32: 1>} : vector<8x128xi32>
      %c0_i32_45 = arith.constant 0 : i32
      %86 = vector.broadcast %c0_i32_45 : i32 to vector<8x128xi32>
      %87 = arith.cmpi eq, %84, %86 : vector<8x128xi32>
      %c0_i32_46 = arith.constant 0 : i32
      %88 = vector.broadcast %c0_i32_46 : i32 to vector<8x128xi32>
      %89 = arith.cmpi eq, %85, %88 : vector<8x128xi32>
      %90 = arith.andi %87, %89 : vector<8x128xi1>
      %c0_i32_47 = arith.constant 0 : i32
      %91 = vector.broadcast %c0_i32_47 : i32 to vector<8x128xi32>
      %92 = arith.cmpi eq, %84, %91 : vector<8x128xi32>
      %c1_i32 = arith.constant 1 : i32
      %93 = vector.broadcast %c1_i32 : i32 to vector<8x128xi32>
      %94 = arith.cmpi eq, %85, %93 : vector<8x128xi32>
      %95 = arith.andi %92, %94 : vector<8x128xi1>
      %cst_48 = arith.constant 0.000000e+00 : f32
      %96 = vector.broadcast %83 : f32 to vector<8x128xf32>
      %97 = vector.broadcast %cst_48 : f32 to vector<8x128xf32>
      %98 = arith.select %95, %96, %97 : vector<8x128xi1>, vector<8x128xf32>
      %99 = vector.broadcast %77 : f32 to vector<8x128xf32>
      %100 = arith.select %90, %99, %98 : vector<8x128xi1>, vector<8x128xf32>
      %c0_49 = arith.constant 0 : index
      %c0_50 = arith.constant 0 : index
      %101 = vector.load %arg5[%c0_49, %c0_50] : memref<8x128xf32, #tpu.memory_space<vmem>>, vector<8x128xf32>
      tpu.vector_store %arg5[%c0_49, %c0_50], %100 {strides = array<i32>} : memref<8x128xf32, #tpu.memory_space<vmem>>, vector<8x128xf32>,
    } else {
    }
    return
  }
  func.func @transform_0(%arg0: i32, %arg1: i32) -> (i32, i32) {
    %c0_i32 = arith.constant 0 : i32
    %c0_i32_0 = arith.constant 0 : i32
    return %arg0, %c0_i32 : i32, i32
  }
  func.func @transform_1(%arg0: i32, %arg1: i32) -> (i32, i32) {
    %c0_i32 = arith.constant 0 : i32
    %c0_i32_0 = arith.constant 0 : i32
    return %arg1, %c0_i32 : i32, i32
  }
  func.func @transform_2(%arg0: i32, %arg1: i32) -> (i32, i32) {
    %c0_i32 = arith.constant 0 : i32
    return %arg0, %arg1 : i32, i32
  }
  func.func @transform_3(%arg0: i32, %arg1: i32) -> (i32, i32) {
    %c0_i32 = arith.constant 0 : i32
    %c0_i32_0 = arith.constant 0 : i32
    return %arg0, %c0_i32 : i32, i32
  }
}

</mosaic_0001>

<llo_original>
// kernel: tpu_custom_call.1
$region0: #{tpu_custom_call.1}
  #allocation0 [shape = 'u32[]', space=smem, size = 0x4, offset = 0x4, fixed_abs, tag = 'smem constant byte address 0x4 - core index']
  #allocation1 [shape = 'u32[144,128]{1,0:T(1,128)}', space=vmem, size = 0x12000, scoped, tag = 'internal scratch']
  #allocation2 [shape = 'f32[64,1]{1,0:T(8,128)}', space=vmem, size = 0x8000, scoped, tag = 'scratch operand']
  #allocation3 [shape = 'f32[64,1]{1,0:T(8,128)}', space=vmem, size = 0x8000, scoped, tag = 'scratch operand']
  #allocation4 [shape = 'f32[64,1]{1,0:T(8,128)}', space=vmem, size = 0x8000, scoped, tag = 'scratch operand']
  #allocation5 [shape = 'f32[64,1]{1,0:T(8,128)}', space=vmem, size = 0x8000, scoped, tag = 'scratch operand']
  %s0 = inlined_call_operand.hbm [shape: bf16[128,128], index: 0, kind: input, shape index: {}]
  %s1 = inlined_call_operand.hbm [shape: bf16[128,128], index: 1, kind: input, shape index: {}]
  %s2 = inlined_call_operand.hbm [shape: s8[128,128], index: 2, kind: input, shape index: {}]
  %s3 = inlined_call_operand.hbm [shape: f32[16,128], index: 3, kind: output, shape index: {}]
  %s4 = sld [smem:[#allocation0]]
  $region65: #{tpu_custom_call.1} parent=0
    _
  %s6 = ssub.s32 1, %s4
  %s7 = scalar_select 0, %s6, %s4
  $region1: #{tpu_custom_call.1} parent=0
    #allocation6 [shape = 'u8[32768]{0}', space=vmem, size = 0x8000, scoped, tag = 'input window, operand 0']
    #allocation7 [shape = 's32[2]{0}', space=sflag, size = 0x8, scoped, tag = 'scoped memory for tpu_custom_call.1']
    #allocation8 [shape = 's32[2]{0}', space=sflag, size = 0x8, scoped, tag = 'scoped memory for tpu_custom_call.1']
    #allocation9 [shape = 'u8[32768]{0}', space=vmem, size = 0x8000, scoped, tag = 'input window, operand 1, single buffered']
    #allocation10 [shape = 's32[1]{0}', space=sflag, size = 0x4, scoped, tag = 'scoped memory for tpu_custom_call.1']
    #allocation11 [shape = 'u8[16384]{0}', space=vmem, size = 0x4000, scoped, tag = 'input window, operand 2']
    #allocation12 [shape = 'u8[8192]{0}', space=vmem, size = 0x2000, scoped, tag = 'output window, operand 0']
    %8 = vsyncpa [#allocation7], 0
    %s9 = scalar_lea.sflag [#allocation7], 1
    %10 = vsyncpa %s9, 0
    %11 = vsyncpa [#allocation10], 0
    %12 = vsyncpa [#allocation8], 0
    %s13 = scalar_lea.sflag [#allocation8], 1
    %14 = vsyncpa %s13, 0
    loop: start=0, step=1, limit=4
    $region2: #{tpu_custom_call.1} parent=1 // loop_pre_header
      _
    $region3: #{tpu_custom_call.1} parent=1 // loop_header
      %s16 = sphi 0, %s20
      %p17 = scmp.ge.s32.totalorder %s16, 4
      %s23 = sphi 0, %s35
      %s24 = sphi 0, %s31
      %s25 = sphi 0, %s23
      %s26 = sphi 0, %s24
      %s27 = sphi 0, %s25
      %s28 = sphi 0, %s26
      %s38 = sphi 0, %s40
      %s41 = sphi 0, %s38
      %s42 = sphi 0, %s41
      %s58 = sphi 0, %s42
      %s64 = sphi 0, %s66
      %s67 = sphi 0, %s64
      %s68 = sphi 0, %s67
      %s84 = sphi 0, %s68
      %s92 = sphi 0, %s94
      %s95 = sphi 0, %s92
      %s96 = sphi 0, %s95
      %s112 = sphi 0, %s96
      %s118 = sphi 0, %s120
      %s121 = sphi 0, %s118
      %s122 = sphi 0, %s121
      %s138 = sphi 0, %s122
    $region4: #{tpu_custom_call.1} parent=1 // loop_header_branch
      %19 = sbr.rel (%p17) target = $region8
    $region5: #{tpu_custom_call.1} parent=1 // loop_body
      %s21 = ssub.s32 %s16, 1
      %s22 = ssub.s32 %s16, 2
      %s29 = sadd.s32 1, %s24
      %p30 = scmp.ge.s32.totalorder %s29, 1
      %s31 = scalar_select %p30, 0, %s29
      %s32 = sadd.s32 1, %s23
      %s33 = scalar_select %p30, %s32, %s23
      %p34 = scmp.ge.s32.totalorder %s33, 2
      %s35 = scalar_select %p34, 0, %s33
      %s36 = ssub.s32 %s23, %s35
      %p37 = scmp.eq.s32.totalorder %s36, 0
      %s39 = sadd.s32 %s38, 1
      %s40 = scalar_select %p37, %s38, %s39
      %p43 = pneg %p37
      %p44 = scmp.eq.s32.totalorder %s16, 1
      %p45 = por %p43, %p44
      %p46 = scmp.ne.s32.totalorder %s38, %s41
      %p47 = scmp.eq.s32.totalorder %s16, 0
      %p48 = por %p46, %p47
      %p49 = scmp.ne.s32.totalorder %s38, %s41
      %p50 = scmp.eq.s32.totalorder %s21, 1
      %p51 = por %p49, %p50
      %p52 = scmp.ne.s32.totalorder %s41, %s42
      %p53 = scmp.eq.s32.totalorder %s21, 0
      %p54 = por %p52, %p53
      %p55 = scmp.ne.s32.totalorder %s41, %s42
      %p56 = scmp.eq.s32.totalorder %s22, 1
      %p57 = por %p55, %p56
      %p59 = scmp.ne.s32.totalorder %s42, %s58
      %p60 = scmp.eq.s32.totalorder %s22, 0
      %p61 = por %p59, %p60
      %s62 = ssub.s32 %s24, %s31
      %p63 = scmp.eq.s32.totalorder %s62, 0
      %s65 = sadd.s32 %s64, 1
      %s66 = scalar_select %p63, %s64, %s65
      %p69 = pneg %p63
      %p70 = scmp.eq.s32.totalorder %s16, 1
      %p71 = por %p69, %p70
      %p72 = scmp.ne.s32.totalorder %s64, %s67
      %p73 = scmp.eq.s32.totalorder %s16, 0
      %p74 = por %p72, %p73
      %p75 = scmp.ne.s32.totalorder %s64, %s67
      %p76 = scmp.eq.s32.totalorder %s21, 1
      %p77 = por %p75, %p76
      %p78 = scmp.ne.s32.totalorder %s67, %s68
      %p79 = scmp.eq.s32.totalorder %s21, 0
      %p80 = por %p78, %p79
      %p81 = scmp.ne.s32.totalorder %s67, %s68
      %p82 = scmp.eq.s32.totalorder %s22, 1
      %p83 = por %p81, %p82
      %p85 = scmp.ne.s32.totalorder %s68, %s84
      %p86 = scmp.eq.s32.totalorder %s22, 0
      %p87 = por %p85, %p86
      %s88 = ssub.s32 %s23, %s35
      %s89 = ssub.s32 %s24, %s31
      %s90 = sor.u32 %s88, %s89
      %p91 = scmp.eq.s32.totalorder %s90, 0
      %s93 = sadd.s32 %s92, 1
      %s94 = scalar_select %p91, %s92, %s93
      %p97 = pneg %p91
      %p98 = scmp.eq.s32.totalorder %s16, 1
      %p99 = por %p97, %p98
      %p100 = scmp.ne.s32.totalorder %s92, %s95
      %p101 = scmp.eq.s32.totalorder %s16, 0
      %p102 = por %p100, %p101
      %p103 = scmp.ne.s32.totalorder %s92, %s95
      %p104 = scmp.eq.s32.totalorder %s21, 1
      %p105 = por %p103, %p104
      %p106 = scmp.ne.s32.totalorder %s95, %s96
      %p107 = scmp.eq.s32.totalorder %s21, 0
      %p108 = por %p106, %p107
      %p109 = scmp.ne.s32.totalorder %s95, %s96
      %p110 = scmp.eq.s32.totalorder %s22, 1
      %p111 = por %p109, %p110
      %p113 = scmp.ne.s32.totalorder %s96, %s112
      %p114 = scmp.eq.s32.totalorder %s22, 0
      %p115 = por %p113, %p114
      %s116 = ssub.s32 %s23, %s35
      %p117 = scmp.eq.s32.totalorder %s116, 0
      %s119 = sadd.s32 %s118, 1
      %s120 = scalar_select %p117, %s118, %s119
      %p123 = pneg %p117
      %p124 = scmp.eq.s32.totalorder %s16, 1
      %p125 = por %p123, %p124
      %p126 = scmp.ne.s32.totalorder %s118, %s121
      %p127 = scmp.eq.s32.totalorder %s16, 0
      %p128 = por %p126, %p127
      %p129 = scmp.ne.s32.totalorder %s118, %s121
      %p130 = scmp.eq.s32.totalorder %s21, 1
      %p131 = por %p129, %p130
      %p132 = scmp.ne.s32.totalorder %s121, %s122
      %p133 = scmp.eq.s32.totalorder %s21, 0
      %p134 = por %p132, %p133
      %p135 = scmp.ne.s32.totalorder %s121, %s122
      %p136 = scmp.eq.s32.totalorder %s22, 1
      %p137 = por %p135, %p136
      %p139 = scmp.ne.s32.totalorder %s122, %s138
      %p140 = scmp.eq.s32.totalorder %s22, 0
      %p141 = por %p139, %p140
      %p142 = scmp.le.s32.totalorder 1, %s16
      %p143 = scmp.lt.s32.totalorder %s16, 3
      %p144 = pnand %p142, %p143
      %p145 = pneg %p144
      // Predicated region
      $region9: #{tpu_custom_call.1} parent=5 // pred_check
        _
      $region10: #{tpu_custom_call.1} parent=5 // pred_check_branch
        %147 = sbr.rel (%p144) target = $region12
      $region11: #{tpu_custom_call.1} parent=5 // pred_region
        %s148 = ssub.s32 %s16, 1
        // Predicated region
        $region13: #{tpu_custom_call.1} parent=11 // pred_check
          %p149 = pneg %p80
        $region14: #{tpu_custom_call.1} parent=11 // pred_check_branch
          %151 = sbr.rel (%p149) target = $region16
        $region15: #{tpu_custom_call.1} parent=11 // pred_region
          %s152 = smul.u32 16, %s26
          %s154 = ssub.s32 1024, 1024
          %155 = vsyncadd [#allocation10], %s154
          %s156 = smul.addr %s152, 64
          %s157 = scalar_lea.hbm %s1, %s156
          %s158 = sshll.u32 [#allocation9], 4
          %s159 = int_to_ptr.vmem [resolvable:$true] %s158
          %164 = dma.hbm_to_vmem [thread:$0]  %s157, 1024, %s159, [#allocation10], 64, 64, 4
        $region16: #{tpu_custom_call.1} parent=11 // pred_fallthru
          _
      $region12: #{tpu_custom_call.1} parent=5 // pred_fallthru
        _
      %p165 = scmp.lt.s32.totalorder %s16, 2
      // Predicated region
      $region17: #{tpu_custom_call.1} parent=5 // pred_check
        %p166 = pneg %p165
      $region18: #{tpu_custom_call.1} parent=5 // pred_check_branch
        %168 = sbr.rel (%p166) target = $region20
      $region19: #{tpu_custom_call.1} parent=5 // pred_region
        // Predicated region
        $region21: #{tpu_custom_call.1} parent=19 // pred_check
          %p169 = pneg %p48
        $region22: #{tpu_custom_call.1} parent=19 // pred_check_branch
          %171 = sbr.rel (%p169) target = $region24
        $region23: #{tpu_custom_call.1} parent=19 // pred_region
          %s172 = sand.u32 %s16, 1
          %s173 = scalar_lea.sflag [#allocation7], %s172
          %s174 = sand.u32 %s38, 1
          %s175 = smul.addr %s174, 32
          %s176 = scalar_lea.vmem [#allocation6], %s175
          %s177 = smul.u32 8, %s23
          %s179 = ssub.s32 512, 512
          %180 = vsyncadd %s173, %s179
          %s181 = smul.addr %s177, 64
          %s182 = scalar_lea.hbm %s0, %s181
          %s183 = sshll.u32 %s176, 4
          %s184 = int_to_ptr.vmem [resolvable:$true] %s183
          %189 = dma.hbm_to_vmem [thread:$0]  %s182, 512, %s184, %s173, 64, 64, 4
        $region24: #{tpu_custom_call.1} parent=19 // pred_fallthru
          _
        // Predicated region
        $region25: #{tpu_custom_call.1} parent=19 // pred_check
          %p190 = pneg %p102
        $region26: #{tpu_custom_call.1} parent=19 // pred_check_branch
          %192 = sbr.rel (%p190) target = $region28
        $region27: #{tpu_custom_call.1} parent=19 // pred_region
          %s193 = sand.u32 %s16, 1
          %s194 = scalar_lea.sflag [#allocation7], %s193
          %s195 = sand.u32 %s92, 1
          %s196 = smul.addr %s195, 16
          %s197 = scalar_lea.vmem [#allocation11], %s196
          %s198 = smul.u32 2, %s23
          %s200 = ssub.s32 256, 256
          %201 = vsyncadd %s194, %s200
          %s202 = sadd.s32 %s24, %s198
          %s203 = smul.addr %s202, 128
          %s204 = scalar_lea.hbm %s2, %s203
          %s205 = sshll.u32 %s197, 4
          %s206 = int_to_ptr.vmem [resolvable:$true] %s205
          %211 = dma.hbm_to_vmem [thread:$0]  %s204, 256, %s206, %s194, 128, 128, 8
        $region28: #{tpu_custom_call.1} parent=19 // pred_fallthru
          _
      $region20: #{tpu_custom_call.1} parent=5 // pred_fallthru
        _
      %p212 = scmp.le.s32.totalorder 1, %s16
      %p213 = scmp.lt.s32.totalorder %s16, 3
      %p214 = pnand %p212, %p213
      %p215 = pneg %p214
      // Predicated region
      $region29: #{tpu_custom_call.1} parent=5 // pred_check
        _
      $region30: #{tpu_custom_call.1} parent=5 // pred_check_branch
        %217 = sbr.rel (%p214) target = $region32
      $region31: #{tpu_custom_call.1} parent=5 // pred_region
        %s218 = ssub.s32 %s16, 1
        %s219 = sand.u32 %s21, 1
        %s220 = scalar_lea.sflag [#allocation7], %s219
        %s221 = sand.u32 %s41, 1
        %s222 = smul.addr %s221, 32
        %s223 = scalar_lea.vmem [#allocation6], %s222
        // Predicated region
        $region33: #{tpu_custom_call.1} parent=31 // pred_check
          %p224 = pneg %p54
        $region34: #{tpu_custom_call.1} parent=31 // pred_check_branch
          %226 = sbr.rel (%p224) target = $region36
        $region35: #{tpu_custom_call.1} parent=31 // pred_region
          %227 = dma.done %s220, 512
        $region36: #{tpu_custom_call.1} parent=31 // pred_fallthru
          _
        // Predicated region
        $region37: #{tpu_custom_call.1} parent=31 // pred_check
          %p228 = pneg %p80
        $region38: #{tpu_custom_call.1} parent=31 // pred_check_branch
          %230 = sbr.rel (%p228) target = $region40
        $region39: #{tpu_custom_call.1} parent=31 // pred_region
          %231 = dma.done [#allocation10], 1024
        $region40: #{tpu_custom_call.1} parent=31 // pred_fallthru
          _
        %s232 = sand.u32 %s21, 1
        %s233 = scalar_lea.sflag [#allocation7], %s232
        %s234 = sand.u32 %s95, 1
        %s235 = smul.addr %s234, 16
        %s236 = scalar_lea.vmem [#allocation11], %s235
        // Predicated region
        $region41: #{tpu_custom_call.1} parent=31 // pred_check
          %p237 = pneg %p108
        $region42: #{tpu_custom_call.1} parent=31 // pred_check_branch
          %239 = sbr.rel (%p237) target = $region44
        $region43: #{tpu_custom_call.1} parent=31 // pred_region
          %240 = dma.done %s233, 256
        $region44: #{tpu_custom_call.1} parent=31 // pred_fallthru
          _
        %s241 = sand.u32 %s21, 1
        %s242 = scalar_lea.sflag [#allocation7], %s241
        %s243 = sand.u32 %s41, 1
        %s244 = smul.addr %s243, 32
        %s245 = scalar_lea.vmem [#allocation6], %s244
        %p246 = pneg %p54
        %p247 = pneg %p51
        %p248 = pneg %p80
        %p249 = pneg %p77
        %s250 = sand.u32 %s21, 1
        %s251 = scalar_lea.sflag [#allocation7], %s250
        %s252 = sand.u32 %s95, 1
        %s253 = smul.addr %s252, 16
        %s254 = scalar_lea.vmem [#allocation11], %s253
        %p255 = pneg %p108
        %p256 = pneg %p105
        %p257 = pneg %p134
        %p258 = pneg %p131
        %s259 = sand.u32 %s121, 1
        %s260 = scalar_lea.sflag [#allocation8], %s259
        %s261 = sand.u32 %s121, 1
        %s262 = smul.addr %s261, 8
        %s263 = scalar_lea.vmem [#allocation12], %s262
        %s264 = smul.u32 8, %s25
        %s265 = smul.u32 16, %s26
        %s266 = smul.u32 2, %s25
        %p270 = scmp.eq.s32.totalorder %s26, 0
        // Predicated region
        $region45: #{tpu_custom_call.1} parent=31 // pred_check
          %p271 = pneg %p270
        $region46: #{tpu_custom_call.1} parent=31 // pred_check_branch
          %273 = sbr.rel (%p271) target = $region48
        $region47: #{tpu_custom_call.1} parent=31 // pred_region
          %vm274 = vcmask 7168
          %275 = vst.msk [vmem:[#allocation2] sm:$0xff] %vm274, -inf
          %276 = vst.msk [vmem:[#allocation2 + $0x8] sm:$0xff] %vm274, -inf
          %277 = vst.msk [vmem:[#allocation2 + $0x10] sm:$0xff] %vm274, -inf
          %278 = vst.msk [vmem:[#allocation2 + $0x18] sm:$0xff] %vm274, -inf
          %279 = vst.msk [vmem:[#allocation2 + $0x20] sm:$0xff] %vm274, -inf
          %280 = vst.msk [vmem:[#allocation2 + $0x28] sm:$0xff] %vm274, -inf
          %281 = vst.msk [vmem:[#allocation2 + $0x30] sm:$0xff] %vm274, -inf
          %282 = vst.msk [vmem:[#allocation2 + $0x38] sm:$0xff] %vm274, -inf
          %283 = vst.msk [vmem:[#allocation3] sm:$0xff] %vm274, 0.0
          %284 = vst.msk [vmem:[#allocation3 + $0x8] sm:$0xff] %vm274, 0.0
          %285 = vst.msk [vmem:[#allocation3 + $0x10] sm:$0xff] %vm274, 0.0
          %286 = vst.msk [vmem:[#allocation3 + $0x18] sm:$0xff] %vm274, 0.0
          %287 = vst.msk [vmem:[#allocation3 + $0x20] sm:$0xff] %vm274, 0.0
          %288 = vst.msk [vmem:[#allocation3 + $0x28] sm:$0xff] %vm274, 0.0
          %289 = vst.msk [vmem:[#allocation3 + $0x30] sm:$0xff] %vm274, 0.0
          %290 = vst.msk [vmem:[#allocation3 + $0x38] sm:$0xff] %vm274, 0.0
          %291 = vst.msk [vmem:[#allocation4] sm:$0xff] %vm274, 0.0
          %292 = vst.msk [vmem:[#allocation4 + $0x8] sm:$0xff] %vm274, 0.0
          %293 = vst.msk [vmem:[#allocation4 + $0x10] sm:$0xff] %vm274, 0.0
          %294 = vst.msk [vmem:[#allocation4 + $0x18] sm:$0xff] %vm274, 0.0
          %295 = vst.msk [vmem:[#allocation4 + $0x20] sm:$0xff] %vm274, 0.0
          %296 = vst.msk [vmem:[#allocation4 + $0x28] sm:$0xff] %vm274, 0.0
          %297 = vst.msk [vmem:[#allocation4 + $0x30] sm:$0xff] %vm274, 0.0
          %298 = vst.msk [vmem:[#allocation4 + $0x38] sm:$0xff] %vm274, 0.0
          %299 = vst.msk [vmem:[#allocation5] sm:$0xff] %vm274, 0.0
          %300 = vst.msk [vmem:[#allocation5 + $0x8] sm:$0xff] %vm274, 0.0
          %301 = vst.msk [vmem:[#allocation5 + $0x10] sm:$0xff] %vm274, 0.0
          %302 = vst.msk [vmem:[#allocation5 + $0x18] sm:$0xff] %vm274, 0.0
          %303 = vst.msk [vmem:[#allocation5 + $0x20] sm:$0xff] %vm274, 0.0
          %304 = vst.msk [vmem:[#allocation5 + $0x28] sm:$0xff] %vm274, 0.0
          %305 = vst.msk [vmem:[#allocation5 + $0x30] sm:$0xff] %vm274, 0.0
          %306 = vst.msk [vmem:[#allocation5 + $0x38] sm:$0xff] %vm274, 0.0
        $region48: #{tpu_custom_call.1} parent=31 // pred_fallthru
          _
        %v307 = vld [vmem:[%s223] sm:$0xf]
        %v308 = vld [vmem:[%s223 + $0x4] sm:$0xf]
        %v309 = vld [vmem:[%s223 + $0x8] sm:$0xf]
        %v310 = vld [vmem:[%s223 + $0xc] sm:$0xf]
        %v311 = vld [vmem:[%s223 + $0x10] sm:$0xf]
        %v312 = vld [vmem:[%s223 + $0x14] sm:$0xf]
        %v313 = vld [vmem:[%s223 + $0x18] sm:$0xf]
        %v314 = vld [vmem:[%s223 + $0x1c] sm:$0xf]
        %v315 = vunpack.c.l.bf16 %v307
        %v316 = vunpack.c.l.bf16 %v308
        %v317 = vunpack.c.l.bf16 %v309
        %v318 = vunpack.c.l.bf16 %v310
        %v319 = vunpack.c.l.bf16 %v311
        %v320 = vunpack.c.l.bf16 %v312
        %v321 = vunpack.c.l.bf16 %v313
        %v322 = vunpack.c.l.bf16 %v314
        %v323 = vmul.f32 %v315, 14.285714
        %v324 = vmul.f32 %v316, 14.285714
        %v325 = vmul.f32 %v317, 14.285714
        %v326 = vmul.f32 %v318, 14.285714
        %v327 = vmul.f32 %v319, 14.285714
        %v328 = vmul.f32 %v320, 14.285714
        %v329 = vmul.f32 %v321, 14.285714
        %v330 = vmul.f32 %v322, 14.285714
        %v331 = vpack.c.bf16 %v324, %v323
        %v332 = vpack.c.bf16 %v326, %v325
        %v333 = vpack.c.bf16 %v328, %v327
        %v334 = vpack.c.bf16 %v330, %v329
        %v335 = vld [vmem:[#allocation9] sm:$0xf]
        %v336 = vld [vmem:[#allocation9 + $0x4] sm:$0xf]
        %v337 = vld [vmem:[#allocation9 + $0x8] sm:$0xf]
        %v338 = vld [vmem:[#allocation9 + $0xc] sm:$0xf]
        %v339 = vld [vmem:[#allocation9 + $0x10] sm:$0xf]
        %v340 = vld [vmem:[#allocation9 + $0x14] sm:$0xf]
        %v341 = vld [vmem:[#allocation9 + $0x18] sm:$0xf]
        %v342 = vld [vmem:[#allocation9 + $0x1c] sm:$0xf]
        %v343 = vld [vmem:[#allocation9 + $0x20] sm:$0xf]
        %v344 = vld [vmem:[#allocation9 + $0x24] sm:$0xf]
        %v345 = vld [vmem:[#allocation9 + $0x28] sm:$0xf]
        %v346 = vld [vmem:[#allocation9 + $0x2c] sm:$0xf]
        %v347 = vld [vmem:[#allocation9 + $0x30] sm:$0xf]
        %v348 = vld [vmem:[#allocation9 + $0x34] sm:$0xf]
        %v349 = vld [vmem:[#allocation9 + $0x38] sm:$0xf]
        %v350 = vld [vmem:[#allocation9 + $0x3c] sm:$0xf]
        %v367 = vunpack.c.l.b16 %v335
        %v368 = vunpack.c.l.b16 %v336
        %v369 = vunpack.c.l.b16 %v337
        %v370 = vunpack.c.l.b16 %v338
        %v371 = vunpack.c.l.b16 %v339
        %v372 = vunpack.c.l.b16 %v340
        %v373 = vunpack.c.l.b16 %v341
        %v374 = vunpack.c.l.b16 %v342
        %v375 = vunpack.c.l.b16 %v343
        %v376 = vunpack.c.l.b16 %v344
        %v377 = vunpack.c.l.b16 %v345
        %v378 = vunpack.c.l.b16 %v346
        %v379 = vunpack.c.l.b16 %v347
        %v380 = vunpack.c.l.b16 %v348
        %v381 = vunpack.c.l.b16 %v349
        %v382 = vunpack.c.l.b16 %v350
        %v383 = vpack.c.b16 %v368, %v367
        %v384 = vpack.c.b16 %v370, %v369
        %v385 = vpack.c.b16 %v372, %v371
        %v386 = vpack.c.b16 %v374, %v373
        %v387 = vpack.c.b16 %v376, %v375
        %v388 = vpack.c.b16 %v378, %v377
        %v389 = vpack.c.b16 %v380, %v379
        %v390 = vpack.c.b16 %v382, %v381
        %399 = vmatprep.subr.bf16.mxu0 0
        %400 = vmatpush1.bf16.xpose.msra.mxu0 %v390
        %401 = vmatprep.subr.bf16.mxu0 0
        %402 = vmatpush1.bf16.xpose.msra.mxu0 %v389
        %403 = vmatprep.subr.bf16.mxu0 0
        %404 = vmatpush1.bf16.xpose.msra.mxu0 %v388
        %405 = vmatprep.subr.bf16.mxu0 0
        %406 = vmatpush1.bf16.xpose.msra.mxu0 %v387
        %407 = vmatprep.subr.bf16.mxu0 0
        %408 = vmatpush1.bf16.xpose.msra.mxu0 %v386
        %409 = vmatprep.subr.bf16.mxu0 0
        %410 = vmatpush1.bf16.xpose.msra.mxu0 %v385
        %411 = vmatprep.subr.bf16.mxu0 0
        %412 = vmatpush1.bf16.xpose.msra.mxu0 %v384
        %413 = vmatprep.subr.bf16.mxu0 0
        %414 = vmatpush1.bf16.xpose.msra.mxu0 %v383
        %415 = vmatprep.subr.bf16.mxu0 0
        %416 = vmatpush2.bf16.xpose.msra.mxu0 0
        %417 = vmatprep.subr.bf16.mxu0 0
        %418 = vmatpush2.bf16.xpose.msra.mxu0 0
        %419 = vmatprep.subr.bf16.mxu0 0
        %420 = vmatpush2.bf16.xpose.msra.mxu0 0
        %421 = vmatprep.subr.bf16.mxu0 0
        %422 = vmatpush2.bf16.xpose.msra.mxu0 0
        %423 = vmatprep.subr.bf16.mxu0 0
        %424 = vmatpush2.bf16.xpose.msra.mxu0 0
        %425 = vmatprep.subr.bf16.mxu0 0
        %426 = vmatpush2.bf16.xpose.msra.mxu0 0
        %427 = vmatprep.subr.bf16.mxu0 0
        %428 = vmatpush2.bf16.xpose.msra.mxu0 0
        %429 = vmatprep.subr.bf16.mxu0 0
        %430 = vmatpush2.bf16.xpose.msra.mxu0 0
        %431 = vmatprep.mubr.bf16.mxu0 0
        %432 = vmatmul.mubr.bf16.gmra.mxu0 %v331
        %v433 = vpop.f32.mrf.mxu0
        %v434 = vadd.f32 0.0, %v433
        %v435 = vpop.f32.mrf.mxu0
        %v436 = vpop.f32.mrf.mxu0
        %v437 = vadd.f32 0.0, %v436
        %v438 = vpop.f32.mrf.mxu0
        %439 = vmatprep.mubr.bf16.mxu0 0
        %440 = vmatmul.mubr.bf16.gmra.mxu0 %v332
        %v441 = vpop.f32.mrf.mxu0
        %v442 = vadd.f32 0.0, %v441
        %v443 = vpop.f32.mrf.mxu0
        %v444 = vpop.f32.mrf.mxu0
        %v445 = vadd.f32 0.0, %v444
        %v446 = vpop.f32.mrf.mxu0
        %447 = vmatprep.mubr.bf16.mxu0 0
        %448 = vmatmul.mubr.bf16.gmra.mxu0 %v333
        %v449 = vpop.f32.mrf.mxu0
        %v450 = vadd.f32 0.0, %v449
        %v451 = vpop.f32.mrf.mxu0
        %v452 = vpop.f32.mrf.mxu0
        %v453 = vadd.f32 0.0, %v452
        %v454 = vpop.f32.mrf.mxu0
        %455 = vmatprep.mubr.bf16.mxu0 0
        %456 = vmatmul.mubr.bf16.gmra.mxu0 %v334
        %v457 = vpop.f32.mrf.mxu0
        %v458 = vadd.f32 0.0, %v457
        %v459 = vpop.f32.mrf.mxu0
        %v460 = vpop.f32.mrf.mxu0
        %v461 = vadd.f32 0.0, %v460
        %v462 = vpop.f32.mrf.mxu0
        %463 = vdwg.mxu0
        %s464 = smul.u32 %s25, 64
        %v465 = vlaneseq
        %v466 = vshrl.u32 %v465, 7
        %v467 = vadd.s32 %v466, 8
        %v468 = vadd.s32 %v466, 16
        %v469 = vadd.s32 %v466, 24
        %v470 = vadd.s32 %v466, 32
        %v471 = vadd.s32 %v466, 40
        %v472 = vadd.s32 %v466, 48
        %v473 = vadd.s32 %v466, 56
        %v474 = vstv %s464
        %v475 = vadd.s32 %v474, %v466
        %v476 = vadd.s32 %v474, %v467
        %v477 = vadd.s32 %v474, %v468
        %v478 = vadd.s32 %v474, %v469
        %v479 = vadd.s32 %v474, %v470
        %v480 = vadd.s32 %v474, %v471
        %v481 = vadd.s32 %v474, %v472
        %v482 = vadd.s32 %v474, %v473
        %s483 = smul.u32 %s26, 128
        %v484 = vlaneseq
        %v485 = vand.u32 %v484, 127
        %v486 = vstv %s483
        %v487 = vadd.s32 %v486, %v485
        %vm488 = vcmp.eq.s32.totalorder %v475, %v487
        %vm489 = vcmp.eq.s32.totalorder %v476, %v487
        %vm490 = vcmp.eq.s32.totalorder %v477, %v487
        %vm491 = vcmp.eq.s32.totalorder %v478, %v487
        %vm492 = vcmp.eq.s32.totalorder %v479, %v487
        %vm493 = vcmp.eq.s32.totalorder %v480, %v487
        %vm494 = vcmp.eq.s32.totalorder %v481, %v487
        %vm495 = vcmp.eq.s32.totalorder %v482, %v487
        %v496 = vsel %vm488, -1e+30, %v434
        %v497 = vsel %vm489, -1e+30, %v437
        %v498 = vsel %vm490, -1e+30, %v442
        %v499 = vsel %vm491, -1e+30, %v445
        %v500 = vsel %vm492, -1e+30, %v450
        %v501 = vsel %vm493, -1e+30, %v453
        %v502 = vsel %vm494, -1e+30, %v458
        %v503 = vsel %vm495, -1e+30, %v461
        %504 = vmax.xlane.f32.xlu0 %v434
        %v505 = vpop.xlane.xlu0 %504
        %506 = vmax.xlane.f32.xlu0 %v437
        %v507 = vpop.xlane.xlu0 %506
        %508 = vmax.xlane.f32.xlu0 %v442
        %v509 = vpop.xlane.xlu0 %508
        %510 = vmax.xlane.f32.xlu0 %v445
        %v511 = vpop.xlane.xlu0 %510
        %512 = vmax.xlane.f32.xlu0 %v450
        %v513 = vpop.xlane.xlu0 %512
        %514 = vmax.xlane.f32.xlu0 %v453
        %v515 = vpop.xlane.xlu0 %514
        %516 = vmax.xlane.f32.xlu0 %v458
        %v517 = vpop.xlane.xlu0 %516
        %518 = vmax.xlane.f32.xlu0 %v461
        %v519 = vpop.xlane.xlu0 %518
        %v520 = vld [vmem:[#allocation2] sm:$0xff]
        %v521 = vld [vmem:[#allocation2 + $0x8] sm:$0xff]
        %v522 = vld [vmem:[#allocation2 + $0x10] sm:$0xff]
        %v523 = vld [vmem:[#allocation2 + $0x18] sm:$0xff]
        %v524 = vld [vmem:[#allocation2 + $0x20] sm:$0xff]
        %v525 = vld [vmem:[#allocation2 + $0x28] sm:$0xff]
        %v526 = vld [vmem:[#allocation2 + $0x30] sm:$0xff]
        %v527 = vld [vmem:[#allocation2 + $0x38] sm:$0xff]
        %v528 = vmax.f32 %v520, %v505
        %v529 = vmax.f32 %v521, %v507
        %v530 = vmax.f32 %v522, %v509
        %v531 = vmax.f32 %v523, %v511
        %v532 = vmax.f32 %v524, %v513
        %v533 = vmax.f32 %v525, %v515
        %v534 = vmax.f32 %v526, %v517
        %v535 = vmax.f32 %v527, %v519
        %v536 = vsub.f32 %v520, %v528
        %v537 = vsub.f32 %v521, %v529
        %v538 = vsub.f32 %v522, %v530
        %v539 = vsub.f32 %v523, %v531
        %v540 = vsub.f32 %v524, %v532
        %v541 = vsub.f32 %v525, %v533
        %v542 = vsub.f32 %v526, %v534
        %v543 = vsub.f32 %v527, %v535
        %v544 = vmul.f32 %v536, 1.442695
        %v545 = vpow.pop %v544
        %v546 = vmul.f32 %v537, 1.442695
        %v547 = vpow.pop %v546
        %v548 = vmul.f32 %v538, 1.442695
        %v549 = vpow.pop %v548
        %v550 = vmul.f32 %v539, 1.442695
        %v551 = vpow.pop %v550
        %v552 = vmul.f32 %v540, 1.442695
        %v553 = vpow.pop %v552
        %v554 = vmul.f32 %v541, 1.442695
        %v555 = vpow.pop %v554
        %v556 = vmul.f32 %v542, 1.442695
        %v557 = vpow.pop %v556
        %v558 = vmul.f32 %v543, 1.442695
        %v559 = vpow.pop %v558
        %561 = vset.pattern.permute.xlu0 0
        %562 = vperm.xlu0 %561, %v528
        %v563 = vpop.permute.xlu0 %562
        %566 = vset.pattern.permute.xlu0 0
        %567 = vperm.xlu0 %566, %v529
        %v568 = vpop.permute.xlu0 %567
        %571 = vset.pattern.permute.xlu0 0
        %572 = vperm.xlu0 %571, %v530
        %v573 = vpop.permute.xlu0 %572
        %576 = vset.pattern.permute.xlu0 0
        %577 = vperm.xlu0 %576, %v531
        %v578 = vpop.permute.xlu0 %577
        %581 = vset.pattern.permute.xlu0 0
        %582 = vperm.xlu0 %581, %v532
        %v583 = vpop.permute.xlu0 %582
        %586 = vset.pattern.permute.xlu0 0
        %587 = vperm.xlu0 %586, %v533
        %v588 = vpop.permute.xlu0 %587
        %591 = vset.pattern.permute.xlu0 0
        %592 = vperm.xlu0 %591, %v534
        %v593 = vpop.permute.xlu0 %592
        %596 = vset.pattern.permute.xlu0 0
        %597 = vperm.xlu0 %596, %v535
        %v598 = vpop.permute.xlu0 %597
        %v600 = vsub.f32 %v496, %v563
        %v601 = vsub.f32 %v497, %v568
        %v602 = vsub.f32 %v498, %v573
        %v603 = vsub.f32 %v499, %v578
        %v604 = vsub.f32 %v500, %v583
        %v605 = vsub.f32 %v501, %v588
        %v606 = vsub.f32 %v502, %v593
        %v607 = vsub.f32 %v503, %v598
        %v608 = vmul.f32 %v600, 1.442695
        %v609 = vpow.pop %v608
        %v610 = vmul.f32 %v601, 1.442695
        %v611 = vpow.pop %v610
        %v612 = vmul.f32 %v602, 1.442695
        %v613 = vpow.pop %v612
        %v614 = vmul.f32 %v603, 1.442695
        %v615 = vpow.pop %v614
        %v616 = vmul.f32 %v604, 1.442695
        %v617 = vpow.pop %v616
        %v618 = vmul.f32 %v605, 1.442695
        %v619 = vpow.pop %v618
        %v620 = vmul.f32 %v606, 1.442695
        %v621 = vpow.pop %v620
        %v622 = vmul.f32 %v607, 1.442695
        %v623 = vpow.pop %v622
        %v624 = vld [vmem:[#allocation3] sm:$0xff]
        %v625 = vld [vmem:[#allocation3 + $0x8] sm:$0xff]
        %v626 = vld [vmem:[#allocation3 + $0x10] sm:$0xff]
        %v627 = vld [vmem:[#allocation3 + $0x18] sm:$0xff]
        %v628 = vld [vmem:[#allocation3 + $0x20] sm:$0xff]
        %v629 = vld [vmem:[#allocation3 + $0x28] sm:$0xff]
        %v630 = vld [vmem:[#allocation3 + $0x30] sm:$0xff]
        %v631 = vld [vmem:[#allocation3 + $0x38] sm:$0xff]
        %v632 = vmul.f32 %v545, %v624
        %v633 = vmul.f32 %v547, %v625
        %v634 = vmul.f32 %v549, %v626
        %v635 = vmul.f32 %v551, %v627
        %v636 = vmul.f32 %v553, %v628
        %v637 = vmul.f32 %v555, %v629
        %v638 = vmul.f32 %v557, %v630
        %v639 = vmul.f32 %v559, %v631
        %640 = vadd.xlane.f32.xlu0 %v609
        %v641 = vpop.xlane.xlu0 %640
        %642 = vadd.xlane.f32.xlu0 %v611
        %v643 = vpop.xlane.xlu0 %642
        %644 = vadd.xlane.f32.xlu0 %v613
        %v645 = vpop.xlane.xlu0 %644
        %646 = vadd.xlane.f32.xlu0 %v615
        %v647 = vpop.xlane.xlu0 %646
        %648 = vadd.xlane.f32.xlu0 %v617
        %v649 = vpop.xlane.xlu0 %648
        %650 = vadd.xlane.f32.xlu0 %v619
        %v651 = vpop.xlane.xlu0 %650
        %652 = vadd.xlane.f32.xlu0 %v621
        %v653 = vpop.xlane.xlu0 %652
        %654 = vadd.xlane.f32.xlu0 %v623
        %v655 = vpop.xlane.xlu0 %654
        %v656 = vadd.f32 %v632, %v641
        %v657 = vadd.f32 %v633, %v643
        %v658 = vadd.f32 %v634, %v645
        %v659 = vadd.f32 %v635, %v647
        %v660 = vadd.f32 %v636, %v649
        %v661 = vadd.f32 %v637, %v651
        %v662 = vadd.f32 %v638, %v653
        %v663 = vadd.f32 %v639, %v655
        %vm664 = vcmask 7168
        %665 = vst.msk [vmem:[#allocation3] sm:$0xff] %vm664, %v656
        %666 = vst.msk [vmem:[#allocation3 + $0x8] sm:$0xff] %vm664, %v657
        %667 = vst.msk [vmem:[#allocation3 + $0x10] sm:$0xff] %vm664, %v658
        %668 = vst.msk [vmem:[#allocation3 + $0x18] sm:$0xff] %vm664, %v659
        %669 = vst.msk [vmem:[#allocation3 + $0x20] sm:$0xff] %vm664, %v660
        %670 = vst.msk [vmem:[#allocation3 + $0x28] sm:$0xff] %vm664, %v661
        %671 = vst.msk [vmem:[#allocation3 + $0x30] sm:$0xff] %vm664, %v662
        %672 = vst.msk [vmem:[#allocation3 + $0x38] sm:$0xff] %vm664, %v663
        %673 = vst.msk [vmem:[#allocation2] sm:$0xff] %vm664, %v528
        %674 = vst.msk [vmem:[#allocation2 + $0x8] sm:$0xff] %vm664, %v529
        %675 = vst.msk [vmem:[#allocation2 + $0x10] sm:$0xff] %vm664, %v530
        %676 = vst.msk [vmem:[#allocation2 + $0x18] sm:$0xff] %vm664, %v531
        %677 = vst.msk [vmem:[#allocation2 + $0x20] sm:$0xff] %vm664, %v532
        %678 = vst.msk [vmem:[#allocation2 + $0x28] sm:$0xff] %vm664, %v533
        %679 = vst.msk [vmem:[#allocation2 + $0x30] sm:$0xff] %vm664, %v534
        %680 = vst.msk [vmem:[#allocation2 + $0x38] sm:$0xff] %vm664, %v535
        %v681 = vld [vmem:[%s236] sm:$0xff]
        %v682 = vld [vmem:[%s236 + $0x8] sm:$0xff]
        %vm683 = vnez %v681
        %vm684 = vnez %v682
        %v685 = vld [vmem:[#allocation4] sm:$0xff]
        %v686 = vld [vmem:[#allocation4 + $0x8] sm:$0xff]
        %v687 = vld [vmem:[#allocation4 + $0x10] sm:$0xff]
        %v688 = vld [vmem:[#allocation4 + $0x18] sm:$0xff]
        %v689 = vld [vmem:[#allocation4 + $0x20] sm:$0xff]
        %v690 = vld [vmem:[#allocation4 + $0x28] sm:$0xff]
        %v691 = vld [vmem:[#allocation4 + $0x30] sm:$0xff]
        %v692 = vld [vmem:[#allocation4 + $0x38] sm:$0xff]
        %v693 = vsel %vm683, 16843009, 0
        %v694 = vsel %vm684, 16843009, 0
        %v695 = vunpack.c.0.s8 %v693
        %v696 = vunpack.c.1.s8 %v693
        %v697 = vunpack.c.2.s8 %v693
        %v698 = vunpack.c.3.s8 %v693
        %v699 = vunpack.c.0.s8 %v694
        %v700 = vunpack.c.1.s8 %v694
        %v701 = vunpack.c.2.s8 %v694
        %v702 = vunpack.c.3.s8 %v694
        %v703 = vpack.c.b16 %v695, %v695
        %v704 = vpack.c.b8 %v703, %v703
        %v705 = vpack.c.b16 %v696, %v696
        %v706 = vpack.c.b8 %v705, %v705
        %v707 = vpack.c.b16 %v697, %v697
        %v708 = vpack.c.b8 %v707, %v707
        %v709 = vpack.c.b16 %v698, %v698
        %v710 = vpack.c.b8 %v709, %v709
        %v711 = vpack.c.b16 %v699, %v699
        %v712 = vpack.c.b8 %v711, %v711
        %v713 = vpack.c.b16 %v700, %v700
        %v714 = vpack.c.b8 %v713, %v713
        %v715 = vpack.c.b16 %v701, %v701
        %v716 = vpack.c.b8 %v715, %v715
        %v717 = vpack.c.b16 %v702, %v702
        %v718 = vpack.c.b8 %v717, %v717
        %vm719 = vnez %v704
        %vm720 = vnez %v706
        %vm721 = vnez %v708
        %vm722 = vnez %v710
        %vm723 = vnez %v712
        %vm724 = vnez %v714
        %vm725 = vnez %v716
        %vm726 = vnez %v718
        %v727 = vsel %vm719, 16843009, 0
        %v728 = vsel %vm720, 16843009, 0
        %v729 = vsel %vm721, 16843009, 0
        %v730 = vsel %vm722, 16843009, 0
        %v731 = vsel %vm723, 16843009, 0
        %v732 = vsel %vm724, 16843009, 0
        %v733 = vsel %vm725, 16843009, 0
        %v734 = vsel %vm726, 16843009, 0
        %v735 = vunpack.c.0.s8 %v727
        %v736 = vunpack.c.0.s8 %v728
        %v737 = vunpack.c.0.s8 %v729
        %v738 = vunpack.c.0.s8 %v730
        %v739 = vunpack.c.0.s8 %v731
        %v740 = vunpack.c.0.s8 %v732
        %v741 = vunpack.c.0.s8 %v733
        %v742 = vunpack.c.0.s8 %v734
        %vm743 = vcmp.ne.s32.totalorder %v735, 0
        %vm744 = vcmp.ne.s32.totalorder %v736, 0
        %vm745 = vcmp.ne.s32.totalorder %v737, 0
        %vm746 = vcmp.ne.s32.totalorder %v738, 0
        %vm747 = vcmp.ne.s32.totalorder %v739, 0
        %vm748 = vcmp.ne.s32.totalorder %v740, 0
        %vm749 = vcmp.ne.s32.totalorder %v741, 0
        %vm750 = vcmp.ne.s32.totalorder %v742, 0
        %v751 = vsel %vm743, 1, 0
        %v752 = vsel %vm744, 1, 0
        %v753 = vsel %vm745, 1, 0
        %v754 = vsel %vm746, 1, 0
        %v755 = vsel %vm747, 1, 0
        %v756 = vsel %vm748, 1, 0
        %v757 = vsel %vm749, 1, 0
        %v758 = vsel %vm750, 1, 0
        %v759 = vcvt.s32.f32 %v751
        %v760 = vcvt.s32.f32 %v752
        %v761 = vcvt.s32.f32 %v753
        %v762 = vcvt.s32.f32 %v754
        %v763 = vcvt.s32.f32 %v755
        %v764 = vcvt.s32.f32 %v756
        %v765 = vcvt.s32.f32 %v757
        %v766 = vcvt.s32.f32 %v758
        %767 = vadd.xlane.f32.xlu0 %v759
        %v768 = vpop.xlane.xlu0 %767
        %769 = vadd.xlane.f32.xlu0 %v760
        %v770 = vpop.xlane.xlu0 %769
        %771 = vadd.xlane.f32.xlu0 %v761
        %v772 = vpop.xlane.xlu0 %771
        %773 = vadd.xlane.f32.xlu0 %v762
        %v774 = vpop.xlane.xlu0 %773
        %775 = vadd.xlane.f32.xlu0 %v763
        %v776 = vpop.xlane.xlu0 %775
        %777 = vadd.xlane.f32.xlu0 %v764
        %v778 = vpop.xlane.xlu0 %777
        %779 = vadd.xlane.f32.xlu0 %v765
        %v780 = vpop.xlane.xlu0 %779
        %781 = vadd.xlane.f32.xlu0 %v766
        %v782 = vpop.xlane.xlu0 %781
        %v783 = vadd.f32 %v685, %v768
        %v784 = vadd.f32 %v686, %v770
        %v785 = vadd.f32 %v687, %v772
        %v786 = vadd.f32 %v688, %v774
        %v787 = vadd.f32 %v689, %v776
        %v788 = vadd.f32 %v690, %v778
        %v789 = vadd.f32 %v691, %v780
        %v790 = vadd.f32 %v692, %v782
        %791 = vst.msk [vmem:[#allocation4] sm:$0xff] %vm664, %v783
        %792 = vst.msk [vmem:[#allocation4 + $0x8] sm:$0xff] %vm664, %v784
        %793 = vst.msk [vmem:[#allocation4 + $0x10] sm:$0xff] %vm664, %v785
        %794 = vst.msk [vmem:[#allocation4 + $0x18] sm:$0xff] %vm664, %v786
        %795 = vst.msk [vmem:[#allocation4 + $0x20] sm:$0xff] %vm664, %v787
        %796 = vst.msk [vmem:[#allocation4 + $0x28] sm:$0xff] %vm664, %v788
        %797 = vst.msk [vmem:[#allocation4 + $0x30] sm:$0xff] %vm664, %v789
        %798 = vst.msk [vmem:[#allocation4 + $0x38] sm:$0xff] %vm664, %v790
        %v799 = vld [vmem:[#allocation5] sm:$0xff]
        %v800 = vld [vmem:[#allocation5 + $0x8] sm:$0xff]
        %v801 = vld [vmem:[#allocation5 + $0x10] sm:$0xff]
        %v802 = vld [vmem:[#allocation5 + $0x18] sm:$0xff]
        %v803 = vld [vmem:[#allocation5 + $0x20] sm:$0xff]
        %v804 = vld [vmem:[#allocation5 + $0x28] sm:$0xff]
        %v805 = vld [vmem:[#allocation5 + $0x30] sm:$0xff]
        %v806 = vld [vmem:[#allocation5 + $0x38] sm:$0xff]
        %v807 = vsel %vm743, %v434, 0.0
        %v808 = vsel %vm744, %v437, 0.0
        %v809 = vsel %vm745, %v442, 0.0
        %v810 = vsel %vm746, %v445, 0.0
        %v811 = vsel %vm747, %v450, 0.0
        %v812 = vsel %vm748, %v453, 0.0
        %v813 = vsel %vm749, %v458, 0.0
        %v814 = vsel %vm750, %v461, 0.0
        %815 = vadd.xlane.f32.xlu0 %v807
        %v816 = vpop.xlane.xlu0 %815
        %817 = vadd.xlane.f32.xlu0 %v808
        %v818 = vpop.xlane.xlu0 %817
        %819 = vadd.xlane.f32.xlu0 %v809
        %v820 = vpop.xlane.xlu0 %819
        %821 = vadd.xlane.f32.xlu0 %v810
        %v822 = vpop.xlane.xlu0 %821
        %823 = vadd.xlane.f32.xlu0 %v811
        %v824 = vpop.xlane.xlu0 %823
        %825 = vadd.xlane.f32.xlu0 %v812
        %v826 = vpop.xlane.xlu0 %825
        %827 = vadd.xlane.f32.xlu0 %v813
        %v828 = vpop.xlane.xlu0 %827
        %829 = vadd.xlane.f32.xlu0 %v814
        %v830 = vpop.xlane.xlu0 %829
        %v831 = vadd.f32 %v799, %v816
        %v832 = vadd.f32 %v800, %v818
        %v833 = vadd.f32 %v801, %v820
        %v834 = vadd.f32 %v802, %v822
        %v835 = vadd.f32 %v803, %v824
        %v836 = vadd.f32 %v804, %v826
        %v837 = vadd.f32 %v805, %v828
        %v838 = vadd.f32 %v806, %v830
        %839 = vst.msk [vmem:[#allocation5] sm:$0xff] %vm664, %v831
        %840 = vst.msk [vmem:[#allocation5 + $0x8] sm:$0xff] %vm664, %v832
        %841 = vst.msk [vmem:[#allocation5 + $0x10] sm:$0xff] %vm664, %v833
        %842 = vst.msk [vmem:[#allocation5 + $0x18] sm:$0xff] %vm664, %v834
        %843 = vst.msk [vmem:[#allocation5 + $0x20] sm:$0xff] %vm664, %v835
        %844 = vst.msk [vmem:[#allocation5 + $0x28] sm:$0xff] %vm664, %v836
        %845 = vst.msk [vmem:[#allocation5 + $0x30] sm:$0xff] %vm664, %v837
        %846 = vst.msk [vmem:[#allocation5 + $0x38] sm:$0xff] %vm664, %v838
        // Predicated region
        $region49: #{tpu_custom_call.1} parent=31 // pred_check
          %p847 = pneg %p270
        $region50: #{tpu_custom_call.1} parent=31 // pred_check_branch
          %849 = sbr.rel (%p847) target = $region52
        $region51: #{tpu_custom_call.1} parent=31 // pred_region
          %v850 = vld [vmem:[#allocation4] sm:$0xff]
          %v851 = vld [vmem:[#allocation4 + $0x8] sm:$0xff]
          %v852 = vld [vmem:[#allocation4 + $0x10] sm:$0xff]
          %v853 = vld [vmem:[#allocation4 + $0x18] sm:$0xff]
          %v854 = vld [vmem:[#allocation4 + $0x20] sm:$0xff]
          %v855 = vld [vmem:[#allocation4 + $0x28] sm:$0xff]
          %v856 = vld [vmem:[#allocation4 + $0x30] sm:$0xff]
          %v857 = vld [vmem:[#allocation4 + $0x38] sm:$0xff]
          %v858 = vld [vmem:[#allocation2] sm:$0xff]
          %v859 = vld [vmem:[#allocation2 + $0x8] sm:$0xff]
          %v860 = vld [vmem:[#allocation2 + $0x10] sm:$0xff]
          %v861 = vld [vmem:[#allocation2 + $0x18] sm:$0xff]
          %v862 = vld [vmem:[#allocation2 + $0x20] sm:$0xff]
          %v863 = vld [vmem:[#allocation2 + $0x28] sm:$0xff]
          %v864 = vld [vmem:[#allocation2 + $0x30] sm:$0xff]
          %v865 = vld [vmem:[#allocation2 + $0x38] sm:$0xff]
          %v866 = vld [vmem:[#allocation3] sm:$0xff]
          %v867 = vld [vmem:[#allocation3 + $0x8] sm:$0xff]
          %v868 = vld [vmem:[#allocation3 + $0x10] sm:$0xff]
          %v869 = vld [vmem:[#allocation3 + $0x18] sm:$0xff]
          %v870 = vld [vmem:[#allocation3 + $0x20] sm:$0xff]
          %v871 = vld [vmem:[#allocation3 + $0x28] sm:$0xff]
          %v872 = vld [vmem:[#allocation3 + $0x30] sm:$0xff]
          %v873 = vld [vmem:[#allocation3 + $0x38] sm:$0xff]
          %v874 = vlog2.pop %v866
          %v875 = vmul.f32 %v874, 0.6931472
          %v876 = vlog2.pop %v867
          %v877 = vmul.f32 %v876, 0.6931472
          %v878 = vlog2.pop %v868
          %v879 = vmul.f32 %v878, 0.6931472
          %v880 = vlog2.pop %v869
          %v881 = vmul.f32 %v880, 0.6931472
          %v882 = vlog2.pop %v870
          %v883 = vmul.f32 %v882, 0.6931472
          %v884 = vlog2.pop %v871
          %v885 = vmul.f32 %v884, 0.6931472
          %v886 = vlog2.pop %v872
          %v887 = vmul.f32 %v886, 0.6931472
          %v888 = vlog2.pop %v873
          %v889 = vmul.f32 %v888, 0.6931472
          %v890 = vadd.f32 %v858, %v875
          %v891 = vadd.f32 %v859, %v877
          %v892 = vadd.f32 %v860, %v879
          %v893 = vadd.f32 %v861, %v881
          %v894 = vadd.f32 %v862, %v883
          %v895 = vadd.f32 %v863, %v885
          %v896 = vadd.f32 %v864, %v887
          %v897 = vadd.f32 %v865, %v889
          %v898 = vld [vmem:[#allocation5] sm:$0xff]
          %v899 = vld [vmem:[#allocation5 + $0x8] sm:$0xff]
          %v900 = vld [vmem:[#allocation5 + $0x10] sm:$0xff]
          %v901 = vld [vmem:[#allocation5 + $0x18] sm:$0xff]
          %v902 = vld [vmem:[#allocation5 + $0x20] sm:$0xff]
          %v903 = vld [vmem:[#allocation5 + $0x28] sm:$0xff]
          %v904 = vld [vmem:[#allocation5 + $0x30] sm:$0xff]
          %v905 = vld [vmem:[#allocation5 + $0x38] sm:$0xff]
          %v906 = vmul.f32 %v850, %v890
          %v907 = vmul.f32 %v851, %v891
          %v908 = vmul.f32 %v852, %v892
          %v909 = vmul.f32 %v853, %v893
          %v910 = vmul.f32 %v854, %v894
          %v911 = vmul.f32 %v855, %v895
          %v912 = vmul.f32 %v856, %v896
          %v913 = vmul.f32 %v857, %v897
          %v914 = vsub.f32 %v898, %v906
          %v915 = vsub.f32 %v899, %v907
          %v916 = vsub.f32 %v900, %v908
          %v917 = vsub.f32 %v901, %v909
          %v918 = vsub.f32 %v902, %v910
          %v919 = vsub.f32 %v903, %v911
          %v920 = vsub.f32 %v904, %v912
          %v921 = vsub.f32 %v905, %v913
          %vm922 = vcmp.gt.f32.partialorder %v850, 0.0
          %vm923 = vcmp.gt.f32.partialorder %v851, 0.0
          %vm924 = vcmp.gt.f32.partialorder %v852, 0.0
          %vm925 = vcmp.gt.f32.partialorder %v853, 0.0
          %vm926 = vcmp.gt.f32.partialorder %v854, 0.0
          %vm927 = vcmp.gt.f32.partialorder %v855, 0.0
          %vm928 = vcmp.gt.f32.partialorder %v856, 0.0
          %vm929 = vcmp.gt.f32.partialorder %v857, 0.0
          %v930 = vsub.f32 0.0, %v914
          %v931 = vsub.f32 0.0, %v915
          %v932 = vsub.f32 0.0, %v916
          %v933 = vsub.f32 0.0, %v917
          %v934 = vsub.f32 0.0, %v918
          %v935 = vsub.f32 0.0, %v919
          %v936 = vsub.f32 0.0, %v920
          %v937 = vsub.f32 0.0, %v921
          %v938 = vsel %vm922, %v850, 1.0
          %v939 = vsel %vm923, %v851, 1.0
          %v940 = vsel %vm924, %v852, 1.0
          %v941 = vsel %vm925, %v853, 1.0
          %v942 = vsel %vm926, %v854, 1.0
          %v943 = vsel %vm927, %v855, 1.0
          %v944 = vsel %vm928, %v856, 1.0
          %v945 = vsel %vm929, %v857, 1.0
          %v946 = vrcp.pop %v938
          %v947 = vmul.f32 %v930, %v946
          %v948 = vrcp.pop %v939
          %v949 = vmul.f32 %v931, %v948
          %v950 = vrcp.pop %v940
          %v951 = vmul.f32 %v932, %v950
          %v952 = vrcp.pop %v941
          %v953 = vmul.f32 %v933, %v952
          %v954 = vrcp.pop %v942
          %v955 = vmul.f32 %v934, %v954
          %v956 = vrcp.pop %v943
          %v957 = vmul.f32 %v935, %v956
          %v958 = vrcp.pop %v944
          %v959 = vmul.f32 %v936, %v958
          %v960 = vrcp.pop %v945
          %v961 = vmul.f32 %v937, %v960
          %v962 = vsel %vm922, %v947, 0.0
          %v963 = vsel %vm923, %v949, 0.0
          %v964 = vsel %vm924, %v951, 0.0
          %v965 = vsel %vm925, %v953, 0.0
          %v966 = vsel %vm926, %v955, 0.0
          %v967 = vsel %vm927, %v957, 0.0
          %v968 = vsel %vm928, %v959, 0.0
          %v969 = vsel %vm929, %v961, 0.0
          %v970 = vsel %vm664, %v962, 0.0
          %v971 = vsel %vm664, %v963, 0.0
          %v972 = vadd.f32 %v970, %v971
          %v973 = vsel %vm664, %v964, 0.0
          %v974 = vadd.f32 %v972, %v973
          %v975 = vsel %vm664, %v965, 0.0
          %v976 = vadd.f32 %v974, %v975
          %v977 = vsel %vm664, %v966, 0.0
          %v978 = vadd.f32 %v976, %v977
          %v979 = vsel %vm664, %v967, 0.0
          %v980 = vadd.f32 %v978, %v979
          %v981 = vsel %vm664, %v968, 0.0
          %v982 = vadd.f32 %v980, %v981
          %v983 = vsel %vm664, %v969, 0.0
          %v984 = vadd.f32 %v982, %v983
          %985 = vadd.xlane.f32.xlu0 %v984
          %v986 = vpop.xlane.xlu0 %985
          %v987 = vrot.slane %v986, 4
          %v988 = vadd.f32 %v986, %v987
          %v989 = vrot.slane %v988, 2
          %v990 = vadd.f32 %v988, %v989
          %v991 = vrot.slane %v990, 1
          %v992 = vadd.f32 %v990, %v991
          %s993 = vtos %v992
          %v994 = vsel %vm922, 1, 0
          %v995 = vsel %vm923, 1, 0
          %v996 = vsel %vm924, 1, 0
          %v997 = vsel %vm925, 1, 0
          %v998 = vsel %vm926, 1, 0
          %v999 = vsel %vm927, 1, 0
          %v1000 = vsel %vm928, 1, 0
          %v1001 = vsel %vm929, 1, 0
          %v1002 = vcvt.s32.f32 %v994
          %v1003 = vcvt.s32.f32 %v995
          %v1004 = vcvt.s32.f32 %v996
          %v1005 = vcvt.s32.f32 %v997
          %v1006 = vcvt.s32.f32 %v998
          %v1007 = vcvt.s32.f32 %v999
          %v1008 = vcvt.s32.f32 %v1000
          %v1009 = vcvt.s32.f32 %v1001
          %v1010 = vsel %vm664, %v1002, 0.0
          %v1011 = vsel %vm664, %v1003, 0.0
          %v1012 = vadd.f32 %v1010, %v1011
          %v1013 = vsel %vm664, %v1004, 0.0
          %v1014 = vadd.f32 %v1012, %v1013
          %v1015 = vsel %vm664, %v1005, 0.0
          %v1016 = vadd.f32 %v1014, %v1015
          %v1017 = vsel %vm664, %v1006, 0.0
          %v1018 = vadd.f32 %v1016, %v1017
          %v1019 = vsel %vm664, %v1007, 0.0
          %v1020 = vadd.f32 %v1018, %v1019
          %v1021 = vsel %vm664, %v1008, 0.0
          %v1022 = vadd.f32 %v1020, %v1021
          %v1023 = vsel %vm664, %v1009, 0.0
          %v1024 = vadd.f32 %v1022, %v1023
          %1025 = vadd.xlane.f32.xlu0 %v1024
          %v1026 = vpop.xlane.xlu0 %1025
          %v1027 = vrot.slane %v1026, 4
          %v1028 = vadd.f32 %v1026, %v1027
          %v1029 = vrot.slane %v1028, 2
          %v1030 = vadd.f32 %v1028, %v1029
          %v1031 = vrot.slane %v1030, 1
          %v1032 = vadd.f32 %v1030, %v1031
          %s1033 = vtos %v1032
          %vm1034 = vcmp.eq.s32.totalorder %v466, 0
          %vm1035 = vcmp.eq.s32.totalorder %v485, 0
          %vm1036 = vmand %vm1034, %vm1035
          %vm1037 = vcmp.eq.s32.totalorder %v485, 1
          %vm1038 = vmand %vm1034, %vm1037
          %v1039 = vstv %s1033
          %v1040 = vsel %vm1038, %v1039, 0.0
          %v1041 = vstv %s993
          %v1042 = vsel %vm1036, %v1041, %v1040
          %1043 = vst [vmem:[%s263] sm:$0xff] %v1042
        $region52: #{tpu_custom_call.1} parent=31 // pred_fallthru
          _
        %s1044 = sand.u32 %s121, 1
        %s1045 = scalar_lea.sflag [#allocation8], %s1044
        %s1046 = sand.u32 %s121, 1
        %s1047 = smul.addr %s1046, 8
        %s1048 = scalar_lea.vmem [#allocation12], %s1047
        // Predicated region
        $region53: #{tpu_custom_call.1} parent=31 // pred_check
          %p1049 = pneg %p131
        $region54: #{tpu_custom_call.1} parent=31 // pred_check_branch
          %1051 = sbr.rel (%p1049) target = $region56
        $region55: #{tpu_custom_call.1} parent=31 // pred_region
          %s1053 = ssub.s32 128, 128
          %1054 = vsyncadd %s1045, %s1053
          %s1055 = smul.addr %s25, 128
          %s1056 = scalar_lea.hbm %s3, %s1055
          %s1058 = sshll.u32 %s1048, 4
          %s1059 = int_to_ptr.vmem [resolvable:$true] %s1058
          %1061 = dma.vmem_to_hbm [thread:$0]  %s1059, 128, %s1056, %s1045
        $region56: #{tpu_custom_call.1} parent=31 // pred_fallthru
          _
      $region32: #{tpu_custom_call.1} parent=5 // pred_fallthru
        _
      %p1062 = scmp.le.s32.totalorder 2, %s16
      // Predicated region
      $region57: #{tpu_custom_call.1} parent=5 // pred_check
        %p1063 = pneg %p1062
      $region58: #{tpu_custom_call.1} parent=5 // pred_check_branch
        %1065 = sbr.rel (%p1063) target = $region60
      $region59: #{tpu_custom_call.1} parent=5 // pred_region
        %s1066 = ssub.s32 %s16, 2
        // Predicated region
        $region61: #{tpu_custom_call.1} parent=59 // pred_check
          %p1067 = pneg %p137
        $region62: #{tpu_custom_call.1} parent=59 // pred_check_branch
          %1069 = sbr.rel (%p1067) target = $region64
        $region63: #{tpu_custom_call.1} parent=59 // pred_region
          %s1070 = sand.u32 %s122, 1
          %s1071 = scalar_lea.sflag [#allocation8], %s1070
          %s1072 = sand.u32 %s122, 1
          %s1073 = smul.addr %s1072, 8
          %s1074 = scalar_lea.vmem [#allocation12], %s1073
          %1075 = dma.done %s1071, 128
        $region64: #{tpu_custom_call.1} parent=59 // pred_fallthru
          _
      $region60: #{tpu_custom_call.1} parent=5 // pred_fallthru
        _
    $region6: #{tpu_custom_call.1} parent=1 // loop_footer
      %s20 = sadd.s32 1, %s16
    $region7: #{tpu_custom_call.1} parent=1 // loop_footer_branch
      %15 = sbr.rel target = $region3
    $region8: #{tpu_custom_call.1} parent=1 // loop_exit
      _
    %1076 = vsyncpa [#allocation7], 1
    %s1077 = scalar_lea.sflag [#allocation7], 1
    %1078 = vsyncpa %s1077, 1
    %1079 = vsyncpa [#allocation10], 1
    %1080 = vsyncpa [#allocation8], 1
    %s1081 = scalar_lea.sflag [#allocation8], 1
    %1082 = vsyncpa %s1081, 1

</llo_original>
